<compile_context>
chip_gen: v6e
topology: v6e:2x2x1
jax: 0.10.0
libtpu: 0.0.40
codegen_flags: <defaults>
</compile_context>

<pallas_src>
import jax
import jax.numpy as jnp
from jax.experimental import pallas as pl
from jax.experimental.pallas import tpu as pltpu

BETA = 0.5
THRESHOLD = 1.0
K = 25  # only used by FastSigmoid.backward; no effect on forward values

_LANE = 128
_TARGET_BLOCK_BYTES = 2 * 1024 * 1024   # per-operand block target (~2 MiB)
_MAX_BLOCK_BYTES = 3 * 1024 * 1024      # forced block larger than this -> XLA fallback
_VMEM_LIMIT_BYTES = 32 * 1024 * 1024    # 4 operands x 2 bufs x 2 MiB = 16 MiB << 32 MiB
_SUBLANE = {1: 32, 2: 16, 4: 8, 8: 8}   # itemsize -> sublane multiple

# Tri-state cache: None = untested, True/False = CORE_PARALLEL usable on this backend.
_CORE_PARALLEL_OK = None


def _leaky_kernel(x_ref, mem_ref, spk_ref, mem_out_ref):
    x = x_ref[...]
    mem = mem_ref[...]
    # spk = Heaviside(mem - threshold)   (FastSigmoid.forward, strict '>')
    spk = (mem - THRESHOLD > 0.0).astype(spk_ref.dtype)
    # reset = (spk - threshold).detach() -> identical values in the forward pass
    reset = spk - THRESHOLD
    # mem' = beta * mem + input_ - reset   (kernel is HBM-bound; VALU has slack)
    mem_out_ref[...] = (BETA * mem + x - reset).astype(mem_out_ref.dtype)
    spk_ref[...] = spk


def _round_down(x, m):
    return (x // m) * m


def _collapse_2d(shape):
    if len(shape) == 0:
        return 1, 1
    if len(shape) == 1:
        return 1, shape[0]
    rows = 1
    for d in shape[:-1]:
        rows *= d
    return rows, shape[-1]


def _choose_blocks(rows, cols, itemsize):
    """Pick a (block_rows, block_cols) tile for the collapsed (rows, cols) view.

    Block dims are multiples of (sublane, 128) or full-extent, so any shape
    lowers without wrapper-side padding.  Returns None if an unaligned dim
    forces a block larger than _MAX_BLOCK_BYTES (caller falls back to XLA).
    """
    sub = _SUBLANE.get(itemsize, 8)

    # Lane (last) dim: tile only when 128-aligned; otherwise use the full
    # extent, which lowers to masked stores on the ragged lane tail — far
    # cheaper than padded HBM copies.
    if cols % _LANE == 0:
        bc_cap = max(_LANE, _round_down(_TARGET_BLOCK_BYTES // (sub * itemsize), _LANE))
        bc = min(cols, bc_cap)
    else:
        bc = cols

    # Sublane (second-to-last) dim: multiple of the dtype's sublane count, or
    # the full extent when rows < sublane.  Ragged row tails are handled by a
    # cdiv grid (edge-block OOB writes are masked by Pallas).
    if rows <= sub:
        br = rows
    else:
        rows_target = max(sub, _round_down(_TARGET_BLOCK_BYTES // (bc * itemsize), sub))
        br_cap = rows if rows % sub == 0 else _round_down(rows, sub)
        br = min(rows_target, br_cap)

    if br * bc * itemsize > _MAX_BLOCK_BYTES:
        return None
    return br, bc


def _reference(input_, mem):
    spk = (mem - THRESHOLD > 0.0).astype(input_.dtype)
    reset = spk - THRESHOLD
    mem_new = BETA * mem + input_ - reset
    return spk, mem_new


def leaky_sigmoid_surrogate(input_, mem):
    """Pallas TPU implementation of LeakySigmoidSurrogate.forward.

    Accepts arbitrary-shaped float inputs (input_.shape == mem.shape).
    Returns (spk, mem_new) with the same shape/dtype as the inputs.
    """
    global _CORE_PARALLEL_OK
    assert input_.shape == mem.shape, "input_ and mem must have the same shape"
    orig_shape = input_.shape
    dtype = input_.dtype
    itemsize = jnp.dtype(dtype).itemsize
    rows, cols = _collapse_2d(orig_shape)
    n = rows * cols
    if n == 0:
        return _reference(input_, mem)

    blocks = _choose_blocks(rows, cols, itemsize)
    if blocks is None:
        # Pathological unaligned shape: a legal tile would not fit VMEM.
        return _reference(input_, mem)
    br, bc = blocks

    # Metadata-only reshapes — no HBM copies, no padding.
    x2d = input_.reshape(rows, cols)
    m2d = mem.reshape(rows, cols)

    grid = (pl.cdiv(rows, br), pl.cdiv(cols, bc))
    blk = pl.BlockSpec((br, bc), lambda i, j: (i, j))
    cost = pl.CostEstimate(
        flops=5 * n,                      # cmp, sub, mul, add, sub per element
        transcendentals=0,
        bytes_accessed=4 * n * itemsize,  # 2 reads + 2 writes -> HBM-bound
    )

    def build(row_semantics):
        return pl.pallas_call(
            _leaky_kernel,
            out_shape=(
                jax.ShapeDtypeStruct((rows, cols), dtype),
                jax.ShapeDtypeStruct((rows, cols), mem.dtype),
            ),
            grid=grid,
            in_specs=[blk, blk],
            out_specs=[blk, blk],
            compiler_params=pltpu.CompilerParams(
                dimension_semantics=(row_semantics, pltpu.ARBITRARY),
                vmem_limit_bytes=_VMEM_LIMIT_BYTES,
            ),
            cost_estimate=cost,
        )

    # Row axis: CORE_PARALLEL shards the streaming loop across both v7x
    # TensorCores (the biggest lever for this HBM-bound kernel).  Some
    # backends / grid shapes may reject it, so fall back to PARALLEL once and
    # cache the decision (PARALLEL is a no-op on single-TC v5e/v6e anyway).
    results = None
    if _CORE_PARALLEL_OK is not False:
        try:
            results = build(pltpu.CORE_PARALLEL)(x2d, m2d)
            _CORE_PARALLEL_OK = True
        except Exception:  # noqa: BLE001 — any lowering/compile rejection -> fallback
            _CORE_PARALLEL_OK = False
            results = None
    if results is None:
        results = build(pltpu.PARALLEL)(x2d, m2d)

    spk2d, mem2d = results
    return spk2d.reshape(orig_shape), mem2d.reshape(orig_shape)


if __name__ == "__main__":
    key = jax.random.PRNGKey(0)

    shapes = [
        (16, 100),      # unaligned lane dim: full-extent block, masked stores, no pad copies
        (128, 512),     # lane/sublane aligned: blocked streaming path
        (2, 4, 16, 16), # >2-D: leading dims collapsed onto the sublane axis
    ]
    for shape in shapes:
        key, k1, k2 = jax.random.split(key, 3)
        x = jax.random.normal(k1, shape, dtype=jnp.float32)
        mem = jax.random.normal(k2, shape, dtype=jnp.float32) * 2.0

        spk, mem_new = leaky_sigmoid_surrogate(x, mem)
        jax.block_until_ready((spk, mem_new))

        spk_ref, mem_ref = _reference(x, mem)
        assert spk.shape == shape and mem_new.shape == shape
        assert bool(jnp.array_equal(spk, spk_ref)), f"spk mismatch for {shape}"
        assert bool(jnp.allclose(mem_new, mem_ref, atol=1e-6)), f"mem mismatch for {shape}"

    print("KERNEL_OK")
</pallas_src>

<mosaic_0001>
module attributes {stable_mosaic.version = 11 : i64} {
  func.func @_leaky_kernel(%arg0: i32, %arg1: i32, %arg2: memref<16x100xf32, #tpu.memory_space<vmem>>, %arg3: memref<16x100xf32, #tpu.memory_space<vmem>>, %arg4: memref<16x100xf32, #tpu.memory_space<vmem>>, %arg5: memref<16x100xf32, #tpu.memory_space<vmem>>) attributes {dimension_semantics = [#tpu.dimension_semantics<core_parallel>, #tpu.dimension_semantics<arbitrary>], iteration_bounds = array<i64: 1, 1>, scalar_prefetch = 0 : i64, scratch_operands = 0 : i64, tpu.core_type = #tpu.core_type<tc>, window_params = [{transform_indices = @transform_0, window_bounds = array<i64: 16, 100>}, {transform_indices = @transform_1, window_bounds = array<i64: 16, 100>}, {transform_indices = @transform_2, window_bounds = array<i64: 16, 100>}, {transform_indices = @transform_3, window_bounds = array<i64: 16, 100>}]} {
    %c0 = arith.constant 0 : index
    %c0_0 = arith.constant 0 : index
    %0 = vector.load %arg2[%c0, %c0_0] : memref<16x100xf32, #tpu.memory_space<vmem>>, vector<16x100xf32>
    %c0_1 = arith.constant 0 : index
    %c0_2 = arith.constant 0 : index
    %1 = vector.load %arg3[%c0_1, %c0_2] : memref<16x100xf32, #tpu.memory_space<vmem>>, vector<16x100xf32>
    %cst = arith.constant 1.000000e+00 : f32
    %2 = vector.broadcast %cst : f32 to vector<16x100xf32>
    %3 = arith.subf %1, %2 : vector<16x100xf32>
    %cst_3 = arith.constant 0.000000e+00 : f32
    %4 = vector.broadcast %cst_3 : f32 to vector<16x100xf32>
    %5 = arith.cmpf ogt, %3, %4 : vector<16x100xf32>
    %6 = arith.extui %5 : vector<16x100xi1> to vector<16x100xi32>
    %7 = arith.sitofp %6 : vector<16x100xi32> to vector<16x100xf32>
    %cst_4 = arith.constant 1.000000e+00 : f32
    %8 = vector.broadcast %cst_4 : f32 to vector<16x100xf32>
    %9 = arith.subf %7, %8 : vector<16x100xf32>
    %cst_5 = arith.constant 5.000000e-01 : f32
    %10 = vector.broadcast %cst_5 : f32 to vector<16x100xf32>
    %11 = arith.mulf %10, %1 : vector<16x100xf32>
    %12 = arith.addf %11, %0 : vector<16x100xf32>
    %13 = arith.subf %12, %9 : vector<16x100xf32>
    %c0_6 = arith.constant 0 : index
    %c0_7 = arith.constant 0 : index
    %14 = vector.load %arg5[%c0_6, %c0_7] : memref<16x100xf32, #tpu.memory_space<vmem>>, vector<16x100xf32>
    tpu.vector_store %arg5[%c0_6, %c0_7], %13 {strides = array<i32>} : memref<16x100xf32, #tpu.memory_space<vmem>>, vector<16x100xf32>,
    %c0_8 = arith.constant 0 : index
    %c0_9 = arith.constant 0 : index
    %15 = vector.load %arg4[%c0_8, %c0_9] : memref<16x100xf32, #tpu.memory_space<vmem>>, vector<16x100xf32>
    tpu.vector_store %arg4[%c0_8, %c0_9], %7 {strides = array<i32>} : memref<16x100xf32, #tpu.memory_space<vmem>>, vector<16x100xf32>,
    return
  }
  func.func @transform_0(%arg0: i32, %arg1: i32) -> (i32, i32) {
    %c0_i32 = arith.constant 0 : i32
    return %arg0, %arg1 : i32, i32
  }
  func.func @transform_1(%arg0: i32, %arg1: i32) -> (i32, i32) {
    %c0_i32 = arith.constant 0 : i32
    return %arg0, %arg1 : i32, i32
  }
  func.func @transform_2(%arg0: i32, %arg1: i32) -> (i32, i32) {
    %c0_i32 = arith.constant 0 : i32
    return %arg0, %arg1 : i32, i32
  }
  func.func @transform_3(%arg0: i32, %arg1: i32) -> (i32, i32) {
    %c0_i32 = arith.constant 0 : i32
    return %arg0, %arg1 : i32, i32
  }
}

module attributes {stable_mosaic.version = 11 : i64} {
  func.func @_leaky_kernel(%arg0: i32, %arg1: i32, %arg2: memref<16x100xf32, #tpu.memory_space<vmem>>, %arg3: memref<16x100xf32, #tpu.memory_space<vmem>>, %arg4: memref<16x100xf32, #tpu.memory_space<vmem>>, %arg5: memref<16x100xf32, #tpu.memory_space<vmem>>) attributes {dimension_semantics = [#tpu.dimension_semantics<parallel>, #tpu.dimension_semantics<arbitrary>], iteration_bounds = array<i64: 1, 1>, scalar_prefetch = 0 : i64, scratch_operands = 0 : i64, tpu.core_type = #tpu.core_type<tc>, window_params = [{transform_indices = @transform_0, window_bounds = array<i64: 16, 100>}, {transform_indices = @transform_1, window_bounds = array<i64: 16, 100>}, {transform_indices = @transform_2, window_bounds = array<i64: 16, 100>}, {transform_indices = @transform_3, window_bounds = array<i64: 16, 100>}]} {
    %c0 = arith.constant 0 : index
    %c0_0 = arith.constant 0 : index
    %0 = vector.load %arg2[%c0, %c0_0] : memref<16x100xf32, #tpu.memory_space<vmem>>, vector<16x100xf32>
    %c0_1 = arith.constant 0 : index
    %c0_2 = arith.constant 0 : index
    %1 = vector.load %arg3[%c0_1, %c0_2] : memref<16x100xf32, #tpu.memory_space<vmem>>, vector<16x100xf32>
    %cst = arith.constant 1.000000e+00 : f32
    %2 = vector.broadcast %cst : f32 to vector<16x100xf32>
    %3 = arith.subf %1, %2 : vector<16x100xf32>
    %cst_3 = arith.constant 0.000000e+00 : f32
    %4 = vector.broadcast %cst_3 : f32 to vector<16x100xf32>
    %5 = arith.cmpf ogt, %3, %4 : vector<16x100xf32>
    %6 = arith.extui %5 : vector<16x100xi1> to vector<16x100xi32>
    %7 = arith.sitofp %6 : vector<16x100xi32> to vector<16x100xf32>
    %cst_4 = arith.constant 1.000000e+00 : f32
    %8 = vector.broadcast %cst_4 : f32 to vector<16x100xf32>
    %9 = arith.subf %7, %8 : vector<16x100xf32>
    %cst_5 = arith.constant 5.000000e-01 : f32
    %10 = vector.broadcast %cst_5 : f32 to vector<16x100xf32>
    %11 = arith.mulf %10, %1 : vector<16x100xf32>
    %12 = arith.addf %11, %0 : vector<16x100xf32>
    %13 = arith.subf %12, %9 : vector<16x100xf32>
    %c0_6 = arith.constant 0 : index
    %c0_7 = arith.constant 0 : index
    %14 = vector.load %arg5[%c0_6, %c0_7] : memref<16x100xf32, #tpu.memory_space<vmem>>, vector<16x100xf32>
    tpu.vector_store %arg5[%c0_6, %c0_7], %13 {strides = array<i32>} : memref<16x100xf32, #tpu.memory_space<vmem>>, vector<16x100xf32>,
    %c0_8 = arith.constant 0 : index
    %c0_9 = arith.constant 0 : index
    %15 = vector.load %arg4[%c0_8, %c0_9] : memref<16x100xf32, #tpu.memory_space<vmem>>, vector<16x100xf32>
    tpu.vector_store %arg4[%c0_8, %c0_9], %7 {strides = array<i32>} : memref<16x100xf32, #tpu.memory_space<vmem>>, vector<16x100xf32>,
    return
  }
  func.func @transform_0(%arg0: i32, %arg1: i32) -> (i32, i32) {
    %c0_i32 = arith.constant 0 : i32
    return %arg0, %arg1 : i32, i32
  }
  func.func @transform_1(%arg0: i32, %arg1: i32) -> (i32, i32) {
    %c0_i32 = arith.constant 0 : i32
    return %arg0, %arg1 : i32, i32
  }
  func.func @transform_2(%arg0: i32, %arg1: i32) -> (i32, i32) {
    %c0_i32 = arith.constant 0 : i32
    return %arg0, %arg1 : i32, i32
  }
  func.func @transform_3(%arg0: i32, %arg1: i32) -> (i32, i32) {
    %c0_i32 = arith.constant 0 : i32
    return %arg0, %arg1 : i32, i32
  }
}

</mosaic_0001>

<llo_original>
// kernel: tpu_custom_call.1
$region0: #{tpu_custom_call.1}
  #allocation0 [shape = 'u32[]', space=smem, size = 0x4, offset = 0x4, fixed_abs, tag = 'smem constant byte address 0x4 - core index']
  #allocation1 [shape = 'u32[144,128]{1,0:T(1,128)}', space=vmem, size = 0x12000, scoped, tag = 'internal scratch']
  %s0 = inlined_call_operand.hbm [shape: f32[16,100], index: 0, kind: input, shape index: {}]
  %s1 = inlined_call_operand.hbm [shape: f32[16,100], index: 1, kind: input, shape index: {}]
  %s2 = inlined_call_operand.hbm [shape: f32[16,100], index: 2, kind: output, shape index: {0}]
  %s3 = inlined_call_operand.hbm [shape: f32[16,100], index: 3, kind: output, shape index: {1}]
  %4 = xla_tuple %s2, %s3
  %s5 = sld [smem:[#allocation0]]
  $region34: #{tpu_custom_call.1} parent=0
    _
  %s7 = ssub.s32 1, %s5
  %s8 = scalar_select 0, %s7, %s5
  $region1: #{tpu_custom_call.1} parent=0
    #allocation2 [shape = 'u8[8192]{0}', space=vmem, size = 0x2000, scoped, tag = 'input window, operand 0, single buffered']
    #allocation3 [shape = 's32[1]{0}', space=sflag, size = 0x4, scoped, tag = 'scoped memory for tpu_custom_call.1']
    #allocation4 [shape = 's32[1]{0}', space=sflag, size = 0x4, scoped, tag = 'scoped memory for tpu_custom_call.1']
    #allocation5 [shape = 'u8[8192]{0}', space=vmem, size = 0x2000, scoped, tag = 'input window, operand 1, single buffered']
    #allocation6 [shape = 's32[1]{0}', space=sflag, size = 0x4, scoped, tag = 'scoped memory for tpu_custom_call.1']
    #allocation7 [shape = 'u8[8192]{0}', space=vmem, size = 0x2000, scoped, tag = 'output window, operand 0, single buffered']
    #allocation8 [shape = 'u8[8192]{0}', space=vmem, size = 0x2000, scoped, tag = 'output window, operand 1, single buffered']
    #allocation9 [shape = 's32[1]{0}', space=sflag, size = 0x4, scoped, tag = 'scoped memory for tpu_custom_call.1']
    %9 = vsyncpa [#allocation3], 0
    %10 = vsyncpa [#allocation6], 0
    %11 = vsyncpa [#allocation4], 0
    %12 = vsyncpa [#allocation9], 0
    // Predicated region
    $region2: #{tpu_custom_call.1} parent=1 // pred_check
      _
    $region3: #{tpu_custom_call.1} parent=1 // pred_check_branch
      %14 = sbr.rel (0) target = $region5
    $region4: #{tpu_custom_call.1} parent=1 // pred_region
      %s15 = smul.u32 2, %s8
      %s17 = ssub.s32 256, 256
      %18 = vsyncadd [#allocation3], %s17
      %s19 = smul.addr %s15, 128
      %s20 = scalar_lea.hbm %s0, %s19
      %s21 = sshll.u32 [#allocation2], 4
      %s22 = int_to_ptr.vmem [resolvable:$true] %s21
      %27 = dma.hbm_to_vmem [thread:$0]  %s20, 256, %s22, [#allocation3], 128, 128, 8
    $region5: #{tpu_custom_call.1} parent=1 // pred_fallthru
      _
    // Predicated region
    $region6: #{tpu_custom_call.1} parent=1 // pred_check
      _
    $region7: #{tpu_custom_call.1} parent=1 // pred_check_branch
      %29 = sbr.rel (0) target = $region9
    $region8: #{tpu_custom_call.1} parent=1 // pred_region
      %s30 = smul.u32 2, %s8
      %s32 = ssub.s32 256, 256
      %33 = vsyncadd [#allocation6], %s32
      %s34 = smul.addr %s30, 128
      %s35 = scalar_lea.hbm %s1, %s34
      %s36 = sshll.u32 [#allocation5], 4
      %s37 = int_to_ptr.vmem [resolvable:$true] %s36
      %42 = dma.hbm_to_vmem [thread:$0]  %s35, 256, %s37, [#allocation6], 128, 128, 8
    $region9: #{tpu_custom_call.1} parent=1 // pred_fallthru
      _
    // Predicated region
    $region10: #{tpu_custom_call.1} parent=1 // pred_check
      _
    $region11: #{tpu_custom_call.1} parent=1 // pred_check_branch
      %44 = sbr.rel (0) target = $region13
    $region12: #{tpu_custom_call.1} parent=1 // pred_region
      %45 = dma.done [#allocation3], 256
    $region13: #{tpu_custom_call.1} parent=1 // pred_fallthru
      _
    // Predicated region
    $region14: #{tpu_custom_call.1} parent=1 // pred_check
      _
    $region15: #{tpu_custom_call.1} parent=1 // pred_check_branch
      %47 = sbr.rel (0) target = $region17
    $region16: #{tpu_custom_call.1} parent=1 // pred_region
      %48 = dma.done [#allocation6], 256
    $region17: #{tpu_custom_call.1} parent=1 // pred_fallthru
      _
    %s49 = smul.u32 2, %s8
    %s50 = smul.u32 2, %s8
    %s51 = smul.u32 2, %s8
    %s52 = smul.u32 2, %s8
    %v53 = vld [vmem:[#allocation2] sm:$0xff]
    %v54 = vld [vmem:[#allocation2 + $0x8] sm:$0xff]
    %v55 = vld [vmem:[#allocation5] sm:$0xff]
    %v56 = vld [vmem:[#allocation5 + $0x8] sm:$0xff]
    %v57 = vsub.f32 %v55, 1.0
    %v58 = vsub.f32 %v56, 1.0
    %vm59 = vcmp.gt.f32.partialorder %v57, 0.0
    %vm60 = vcmp.gt.f32.partialorder %v58, 0.0
    %v61 = vsel %vm59, 1, 0
    %v62 = vsel %vm60, 1, 0
    %v63 = vcvt.s32.f32 %v61
    %v64 = vcvt.s32.f32 %v62
    %v65 = vsub.f32 %v63, 1.0
    %v66 = vsub.f32 %v64, 1.0
    %v67 = vmul.f32 %v55, 0.5
    %v68 = vmul.f32 %v56, 0.5
    %v69 = vadd.f32 %v67, %v53
    %v70 = vadd.f32 %v68, %v54
    %v71 = vsub.f32 %v69, %v65
    %v72 = vsub.f32 %v70, %v66
    %vm73 = vcmask 818176
    %74 = vst.msk [vmem:[#allocation8] sm:$0xff] %vm73, %v71
    %75 = vst.msk [vmem:[#allocation8 + $0x8] sm:$0xff] %vm73, %v72
    %76 = vst.msk [vmem:[#allocation7] sm:$0xff] %vm73, %v63
    %77 = vst.msk [vmem:[#allocation7 + $0x8] sm:$0xff] %vm73, %v64
    // Predicated region
    $region18: #{tpu_custom_call.1} parent=1 // pred_check
      _
    $region19: #{tpu_custom_call.1} parent=1 // pred_check_branch
      %79 = sbr.rel (0) target = $region21
    $region20: #{tpu_custom_call.1} parent=1 // pred_region
      %s80 = smul.u32 2, %s8
      %s82 = ssub.s32 256, 256
      %83 = vsyncadd [#allocation4], %s82
      %s84 = smul.addr %s80, 128
      %s85 = scalar_lea.hbm %s2, %s84
      %s86 = sshll.u32 [#allocation7], 4
      %s87 = int_to_ptr.vmem [resolvable:$true] %s86
      %92 = dma.vmem_to_hbm [thread:$0]  %s87, 256, %s85, [#allocation4], 128, 128, 8
    $region21: #{tpu_custom_call.1} parent=1 // pred_fallthru
      _
    // Predicated region
    $region22: #{tpu_custom_call.1} parent=1 // pred_check
      _
    $region23: #{tpu_custom_call.1} parent=1 // pred_check_branch
      %94 = sbr.rel (0) target = $region25
    $region24: #{tpu_custom_call.1} parent=1 // pred_region
      %s95 = smul.u32 2, %s8
      %s97 = ssub.s32 256, 256
      %98 = vsyncadd [#allocation9], %s97
      %s99 = smul.addr %s95, 128
      %s100 = scalar_lea.hbm %s3, %s99
      %s101 = sshll.u32 [#allocation8], 4
      %s102 = int_to_ptr.vmem [resolvable:$true] %s101
      %107 = dma.vmem_to_hbm [thread:$0]  %s102, 256, %s100, [#allocation9], 128, 128, 8
    $region25: #{tpu_custom_call.1} parent=1 // pred_fallthru
      _
    // Predicated region
    $region26: #{tpu_custom_call.1} parent=1 // pred_check
      _
    $region27: #{tpu_custom_call.1} parent=1 // pred_check_branch
      %109 = sbr.rel (0) target = $region29
    $region28: #{tpu_custom_call.1} parent=1 // pred_region
      %110 = dma.done [#allocation4], 256
    $region29: #{tpu_custom_call.1} parent=1 // pred_fallthru
      _
    // Predicated region
    $region30: #{tpu_custom_call.1} parent=1 // pred_check
      _
    $region31: #{tpu_custom_call.1} parent=1 // pred_check_branch
      %112 = sbr.rel (0) target = $region33
    $region32: #{tpu_custom_call.1} parent=1 // pred_region
      %113 = dma.done [#allocation9], 256
    $region33: #{tpu_custom_call.1} parent=1 // pred_fallthru
      _
    %114 = vsyncpa [#allocation3], 1
    %115 = vsyncpa [#allocation6], 1
    %116 = vsyncpa [#allocation4], 1
    %117 = vsyncpa [#allocation9], 1

// kernel: tpu_custom_call.1
$region0: #{tpu_custom_call.1}
  #allocation0 [shape = 'u32[]', space=smem, size = 0x4, offset = 0x4, fixed_abs, tag = 'smem constant byte address 0x4 - core index']
  #allocation1 [shape = 'u32[144,128]{1,0:T(1,128)}', space=vmem, size = 0x12000, scoped, tag = 'internal scratch']
  %s0 = inlined_call_operand.hbm [shape: f32[16,100], index: 0, kind: input, shape index: {}]
  %s1 = inlined_call_operand.hbm [shape: f32[16,100], index: 1, kind: input, shape index: {}]
  %s2 = inlined_call_operand.hbm [shape: f32[16,100], index: 2, kind: output, shape index: {0}]
  %s3 = inlined_call_operand.hbm [shape: f32[16,100], index: 3, kind: output, shape index: {1}]
  %4 = xla_tuple %s2, %s3
  %s5 = sld [smem:[#allocation0]]
  $region34: #{tpu_custom_call.1} parent=0
    _
  %s7 = ssub.s32 1, %s5
  %s8 = scalar_select 0, %s7, %s5
  $region1: #{tpu_custom_call.1} parent=0
    #allocation2 [shape = 'u8[8192]{0}', space=vmem, size = 0x2000, scoped, tag = 'input window, operand 0, single buffered']
    #allocation3 [shape = 's32[1]{0}', space=sflag, size = 0x4, scoped, tag = 'scoped memory for tpu_custom_call.1']
    #allocation4 [shape = 's32[1]{0}', space=sflag, size = 0x4, scoped, tag = 'scoped memory for tpu_custom_call.1']
    #allocation5 [shape = 'u8[8192]{0}', space=vmem, size = 0x2000, scoped, tag = 'input window, operand 1, single buffered']
    #allocation6 [shape = 's32[1]{0}', space=sflag, size = 0x4, scoped, tag = 'scoped memory for tpu_custom_call.1']
    #allocation7 [shape = 'u8[8192]{0}', space=vmem, size = 0x2000, scoped, tag = 'output window, operand 0, single buffered']
    #allocation8 [shape = 'u8[8192]{0}', space=vmem, size = 0x2000, scoped, tag = 'output window, operand 1, single buffered']
    #allocation9 [shape = 's32[1]{0}', space=sflag, size = 0x4, scoped, tag = 'scoped memory for tpu_custom_call.1']
    %9 = vsyncpa [#allocation3], 0
    %10 = vsyncpa [#allocation6], 0
    %11 = vsyncpa [#allocation4], 0
    %12 = vsyncpa [#allocation9], 0
    // Predicated region
    $region2: #{tpu_custom_call.1} parent=1 // pred_check
      _
    $region3: #{tpu_custom_call.1} parent=1 // pred_check_branch
      %14 = sbr.rel (0) target = $region5
    $region4: #{tpu_custom_call.1} parent=1 // pred_region
      %s16 = ssub.s32 256, 256
      %17 = vsyncadd [#allocation3], %s16
      %s18 = sshll.u32 [#allocation2], 4
      %s19 = int_to_ptr.vmem [resolvable:$true] %s18
      %24 = dma.hbm_to_vmem [thread:$0]  %s0, 256, %s19, [#allocation3], 128, 128, 8
    $region5: #{tpu_custom_call.1} parent=1 // pred_fallthru
      _
    // Predicated region
    $region6: #{tpu_custom_call.1} parent=1 // pred_check
      _
    $region7: #{tpu_custom_call.1} parent=1 // pred_check_branch
      %26 = sbr.rel (0) target = $region9
    $region8: #{tpu_custom_call.1} parent=1 // pred_region
      %s28 = ssub.s32 256, 256
      %29 = vsyncadd [#allocation6], %s28
      %s30 = sshll.u32 [#allocation5], 4
      %s31 = int_to_ptr.vmem [resolvable:$true] %s30
      %36 = dma.hbm_to_vmem [thread:$0]  %s1, 256, %s31, [#allocation6], 128, 128, 8
    $region9: #{tpu_custom_call.1} parent=1 // pred_fallthru
      _
    // Predicated region
    $region10: #{tpu_custom_call.1} parent=1 // pred_check
      _
    $region11: #{tpu_custom_call.1} parent=1 // pred_check_branch
      %38 = sbr.rel (0) target = $region13
    $region12: #{tpu_custom_call.1} parent=1 // pred_region
      %39 = dma.done [#allocation3], 256
    $region13: #{tpu_custom_call.1} parent=1 // pred_fallthru
      _
    // Predicated region
    $region14: #{tpu_custom_call.1} parent=1 // pred_check
      _
    $region15: #{tpu_custom_call.1} parent=1 // pred_check_branch
      %41 = sbr.rel (0) target = $region17
    $region16: #{tpu_custom_call.1} parent=1 // pred_region
      %42 = dma.done [#allocation6], 256
    $region17: #{tpu_custom_call.1} parent=1 // pred_fallthru
      _
    %v43 = vld [vmem:[#allocation2] sm:$0xff]
    %v44 = vld [vmem:[#allocation2 + $0x8] sm:$0xff]
    %v45 = vld [vmem:[#allocation5] sm:$0xff]
    %v46 = vld [vmem:[#allocation5 + $0x8] sm:$0xff]
    %v47 = vsub.f32 %v45, 1.0
    %v48 = vsub.f32 %v46, 1.0
    %vm49 = vcmp.gt.f32.partialorder %v47, 0.0
    %vm50 = vcmp.gt.f32.partialorder %v48, 0.0
    %v51 = vsel %vm49, 1, 0
    %v52 = vsel %vm50, 1, 0
    %v53 = vcvt.s32.f32 %v51
    %v54 = vcvt.s32.f32 %v52
    %v55 = vsub.f32 %v53, 1.0
    %v56 = vsub.f32 %v54, 1.0
    %v57 = vmul.f32 %v45, 0.5
    %v58 = vmul.f32 %v46, 0.5
    %v59 = vadd.f32 %v57, %v43
    %v60 = vadd.f32 %v58, %v44
    %v61 = vsub.f32 %v59, %v55
    %v62 = vsub.f32 %v60, %v56
    %vm63 = vcmask 818176
    %64 = vst.msk [vmem:[#allocation8] sm:$0xff] %vm63, %v61
    %65 = vst.msk [vmem:[#allocation8 + $0x8] sm:$0xff] %vm63, %v62
    %66 = vst.msk [vmem:[#allocation7] sm:$0xff] %vm63, %v53
    %67 = vst.msk [vmem:[#allocation7 + $0x8] sm:$0xff] %vm63, %v54
    // Predicated region
    $region18: #{tpu_custom_call.1} parent=1 // pred_check
      _
    $region19: #{tpu_custom_call.1} parent=1 // pred_check_branch
      %69 = sbr.rel (0) target = $region21
    $region20: #{tpu_custom_call.1} parent=1 // pred_region
      %s71 = ssub.s32 256, 256
      %72 = vsyncadd [#allocation4], %s71
      %s73 = sshll.u32 [#allocation7], 4
      %s74 = int_to_ptr.vmem [resolvable:$true] %s73
      %79 = dma.vmem_to_hbm [thread:$0]  %s74, 256, %s2, [#allocation4], 128, 128, 8
    $region21: #{tpu_custom_call.1} parent=1 // pred_fallthru
      _
    // Predicated region
    $region22: #{tpu_custom_call.1} parent=1 // pred_check
      _
    $region23: #{tpu_custom_call.1} parent=1 // pred_check_branch
      %81 = sbr.rel (0) target = $region25
    $region24: #{tpu_custom_call.1} parent=1 // pred_region
      %s83 = ssub.s32 256, 256
      %84 = vsyncadd [#allocation9], %s83
      %s85 = sshll.u32 [#allocation8], 4
      %s86 = int_to_ptr.vmem [resolvable:$true] %s85
      %91 = dma.vmem_to_hbm [thread:$0]  %s86, 256, %s3, [#allocation9], 128, 128, 8
    $region25: #{tpu_custom_call.1} parent=1 // pred_fallthru
      _
    // Predicated region
    $region26: #{tpu_custom_call.1} parent=1 // pred_check
      _
    $region27: #{tpu_custom_call.1} parent=1 // pred_check_branch
      %93 = sbr.rel (0) target = $region29
    $region28: #{tpu_custom_call.1} parent=1 // pred_region
      %94 = dma.done [#allocation4], 256
    $region29: #{tpu_custom_call.1} parent=1 // pred_fallthru
      _
    // Predicated region
    $region30: #{tpu_custom_call.1} parent=1 // pred_check
      _
    $region31: #{tpu_custom_call.1} parent=1 // pred_check_branch
      %96 = sbr.rel (0) target = $region33
    $region32: #{tpu_custom_call.1} parent=1 // pred_region
      %97 = dma.done [#allocation9], 256
    $region33: #{tpu_custom_call.1} parent=1 // pred_fallthru
      _
    %98 = vsyncpa [#allocation3], 1
    %99 = vsyncpa [#allocation6], 1
    %100 = vsyncpa [#allocation4], 1
    %101 = vsyncpa [#allocation9], 1

</llo_original>
